<compile_context>
chip_gen: v6e
topology: v6e:2x2x1
jax: 0.10.0
libtpu: 0.0.40
codegen_flags: <defaults>
</compile_context>

<pallas_src>
import jax
import jax.numpy as jnp
from jax.experimental import pallas as pl
from jax.experimental.pallas import tpu as pltpu


# ---------------------------------------------------------------------------
# Phase 1: input projection  gx_dir = x @ W_ih_dir + (b_ih + b_hh)_dir
# ---------------------------------------------------------------------------
def _proj_kernel(x_ref, wxf_ref, wxb_ref, bxf_ref, bxb_ref, gxf_ref, gxb_ref):
    Tt, Bp, Ep = x_ref.shape
    G = gxf_ref.shape[-1]
    x2 = x_ref[...].reshape(Tt * Bp, Ep).astype(jnp.bfloat16)
    gf = jnp.dot(x2, wxf_ref[...], preferred_element_type=jnp.float32) + bxf_ref[...]
    gb = jnp.dot(x2, wxb_ref[...], preferred_element_type=jnp.float32) + bxb_ref[...]
    gxf_ref[...] = gf.reshape(Tt, Bp, G)
    gxb_ref[...] = gb.reshape(Tt, Bp, G)


# ---------------------------------------------------------------------------
# Phase 2: bidirectional recurrence, grid=(Tp,) "arbitrary", carried state.
# Step i handles fwd time t=i and bwd time t=Tp-1-i (interleaved chains).
# ---------------------------------------------------------------------------
def _recurrence_kernel(len_ref, gxf_ref, gxb_ref, whhf_ref, whhb_ref,
                       wrht_ref, wrhb_ref, brh_ref, wrct_ref, wrcb_ref, brc_ref,
                       outf_ref, outb_ref, hid_ref, cell_ref,
                       hf, cf, hb, cb):
    i = pl.program_id(0)
    Tp = pl.num_programs(0)
    Bp, Hp = hf.shape

    @pl.when(i == 0)
    def _init():
        z = jnp.zeros((Bp, Hp), jnp.float32)
        hf[...] = z
        cf[...] = z
        hb[...] = z
        cb[...] = z

    lengths = len_ref[...]                      # (Bp, 1) int32

    def cell_step(gx, h, c, whh_ref):
        # bf16 MXU operands, f32 accumulation; PyTorch gate order (i, f, g, o),
        # per-gate slices consumed immediately (low vreg live range).
        gates = gx + jnp.dot(h.astype(jnp.bfloat16), whh_ref[...],
                             preferred_element_type=jnp.float32)
        ig = jax.nn.sigmoid(gates[:, 0:Hp]) * jnp.tanh(gates[:, 2 * Hp:3 * Hp])
        c_new = jax.nn.sigmoid(gates[:, Hp:2 * Hp]) * c + ig
        h_new = jax.nn.sigmoid(gates[:, 3 * Hp:4 * Hp]) * jnp.tanh(c_new)
        return h_new, c_new

    # Two independent chains per step -> LLO can overlap the two matmuls.
    hf_new, cf_new = cell_step(gxf_ref[0], hf[...], cf[...], whhf_ref)
    hb_new, cb_new = cell_step(gxb_ref[0], hb[...], cb[...], whhb_ref)

    # Packed-sequence semantics: freeze state and emit zeros once t >= length.
    valid_f = i < lengths
    hf[...] = jnp.where(valid_f, hf_new, hf[...])
    cf[...] = jnp.where(valid_f, cf_new, cf[...])
    outf_ref[0] = jnp.where(valid_f, hf[...], 0.0)

    valid_b = (Tp - 1 - i) < lengths
    hb[...] = jnp.where(valid_b, hb_new, hb[...])
    cb[...] = jnp.where(valid_b, cb_new, cb[...])
    outb_ref[0] = jnp.where(valid_b, hb[...], 0.0)

    # reduce_hidden / reduce_cell (Linear(2H->H) + ReLU) fused into last step.
    @pl.when(i == Tp - 1)
    def _finalize():
        hid = (jnp.dot(hf[...].astype(jnp.bfloat16), wrht_ref[...],
                       preferred_element_type=jnp.float32)
               + jnp.dot(hb[...].astype(jnp.bfloat16), wrhb_ref[...],
                         preferred_element_type=jnp.float32)
               + brh_ref[...])
        cel = (jnp.dot(cf[...].astype(jnp.bfloat16), wrct_ref[...],
                       preferred_element_type=jnp.float32)
               + jnp.dot(cb[...].astype(jnp.bfloat16), wrcb_ref[...],
                         preferred_element_type=jnp.float32)
               + brc_ref[...])
        hid_ref[...] = jnp.maximum(hid, 0.0)
        cell_ref[...] = jnp.maximum(cel, 0.0)


# ---------------------------------------------------------------------------
# Phase 3: features Linear(2H->2H, no bias) + (B, T, 2H) output assembly.
# ---------------------------------------------------------------------------
def _feat_kernel(hf_ref, hb_ref, wft_ref, wfb_ref, feat_ref, out_ref):
    Tt, Bp, Hp = hf_ref.shape
    hf = hf_ref[...]
    hb = hb_ref[...]
    feat = (jnp.dot(hf.reshape(Tt * Bp, Hp).astype(jnp.bfloat16), wft_ref[...],
                    preferred_element_type=jnp.float32)
            + jnp.dot(hb.reshape(Tt * Bp, Hp).astype(jnp.bfloat16), wfb_ref[...],
                      preferred_element_type=jnp.float32))
    feat_ref[...] = feat.reshape(Tt, Bp, 2 * Hp)
    # lane-dense (Bp, Tt, 2Hp) output tile; major-dim transpose is VMEM-local.
    out_ref[:, :, 0:Hp] = jnp.transpose(hf, (1, 0, 2))
    out_ref[:, :, Hp:2 * Hp] = jnp.transpose(hb, (1, 0, 2))


# ---------------------------------------------------------------------------
# Wrapper: padding + per-gate padding + three pallas_calls
# ---------------------------------------------------------------------------
def _round_up(x, m):
    return (x + m - 1) // m * m


def _pad2d(a, rows, cols):
    return jnp.pad(a, ((0, rows - a.shape[0]), (0, cols - a.shape[1])))


def _pad_gate_cols(w, H, Hp):
    """Zero-pad each of the 4 gate blocks (PyTorch order i,f,g,o) from H to Hp."""
    if H == Hp:
        return w
    blocks = [w[:, k * H:(k + 1) * H] for k in range(4)]
    return jnp.concatenate([jnp.pad(b, ((0, 0), (0, Hp - H))) for b in blocks],
                           axis=1)


def _chunk(Tp, Bp, max_rows, multiple=1):
    """Largest divisor of Tp that is a multiple of `multiple` with chunk*Bp<=max_rows."""
    best = multiple
    for d in range(multiple, Tp + 1, multiple):
        if Tp % d == 0 and d * Bp <= max_rows:
            best = d
    return best


def encoder_forward(inputs, inputs_lengths, params):
    T, B, E = inputs.shape
    H = params["whh_f"].shape[0]

    f32, bf16 = jnp.float32, jnp.bfloat16
    Bp = _round_up(B, 16)          # 16 for bf16 sublane packing
    Ep = _round_up(E, 128)
    Hp = _round_up(H, 128)
    Tp = _round_up(T, 8)           # padded steps are masked (length <= T)

    x_p = jnp.pad(inputs.astype(f32), ((0, Tp - T), (0, Bp - B), (0, Ep - E)))
    len_p = jnp.pad(inputs_lengths.astype(jnp.int32), (0, Bp - B)).reshape(Bp, 1)

    # ---- weight prep: per-gate zero padding, bf16 MXU operands ----
    wxf = _pad2d(_pad_gate_cols(params["wih_f"], H, Hp), Ep, 4 * Hp).astype(bf16)
    wxb = _pad2d(_pad_gate_cols(params["wih_b"], H, Hp), Ep, 4 * Hp).astype(bf16)
    bxf = _pad_gate_cols(params["b_f"], H, Hp).astype(f32)
    bxb = _pad_gate_cols(params["b_b"], H, Hp).astype(f32)
    whhf = _pad2d(_pad_gate_cols(params["whh_f"], H, Hp), Hp, 4 * Hp).astype(bf16)
    whhb = _pad2d(_pad_gate_cols(params["whh_b"], H, Hp), Hp, 4 * Hp).astype(bf16)

    wft = _pad2d(params["wfeat"][:H, :], Hp, 2 * Hp).astype(bf16)
    wfb = _pad2d(params["wfeat"][H:, :], Hp, 2 * Hp).astype(bf16)

    wrht = _pad2d(params["wredh"][:H, :], Hp, Hp).astype(bf16)
    wrhb = _pad2d(params["wredh"][H:, :], Hp, Hp).astype(bf16)
    brh = _pad2d(params["bredh"], 1, Hp).astype(f32)
    wrct = _pad2d(params["wredc"][:H, :], Hp, Hp).astype(bf16)
    wrcb = _pad2d(params["wredc"][H:, :], Hp, Hp).astype(bf16)
    brc = _pad2d(params["bredc"], 1, Hp).astype(f32)

    # Generation-safe scoped VMEM cap (actual need per call is a few MiB).
    cparams = lambda sem: pltpu.CompilerParams(
        dimension_semantics=sem, vmem_limit_bytes=32 * 1024 * 1024)

    # ---------------- phase 1: hoisted input projection --------------------
    Tt = _chunk(Tp, Bp, max_rows=256)
    gxf, gxb = pl.pallas_call(
        _proj_kernel,
        grid=(Tp // Tt,),
        in_specs=[
            pl.BlockSpec((Tt, Bp, Ep), lambda j: (j, 0, 0)),
            pl.BlockSpec((Ep, 4 * Hp), lambda j: (0, 0)),
            pl.BlockSpec((Ep, 4 * Hp), lambda j: (0, 0)),
            pl.BlockSpec((1, 4 * Hp), lambda j: (0, 0)),
            pl.BlockSpec((1, 4 * Hp), lambda j: (0, 0)),
        ],
        out_specs=(
            pl.BlockSpec((Tt, Bp, 4 * Hp), lambda j: (j, 0, 0)),
            pl.BlockSpec((Tt, Bp, 4 * Hp), lambda j: (j, 0, 0)),
        ),
        out_shape=(
            jax.ShapeDtypeStruct((Tp, Bp, 4 * Hp), f32),
            jax.ShapeDtypeStruct((Tp, Bp, 4 * Hp), f32),
        ),
        compiler_params=cparams(("parallel",)),
    )(x_p, wxf, wxb, bxf, bxb)

    # ---------------- phase 2: serial recurrence (carried state) -----------
    outf, outb, hid_p, cell_p = pl.pallas_call(
        _recurrence_kernel,
        grid=(Tp,),
        in_specs=[
            pl.BlockSpec((Bp, 1), lambda i: (0, 0)),                       # lengths
            pl.BlockSpec((1, Bp, 4 * Hp), lambda i: (i, 0, 0)),            # gx fwd
            pl.BlockSpec((1, Bp, 4 * Hp), lambda i: (Tp - 1 - i, 0, 0)),   # gx bwd
            pl.BlockSpec((Hp, 4 * Hp), lambda i: (0, 0)),                  # whh_f
            pl.BlockSpec((Hp, 4 * Hp), lambda i: (0, 0)),                  # whh_b
            pl.BlockSpec((Hp, Hp), lambda i: (0, 0)),                      # wredh top
            pl.BlockSpec((Hp, Hp), lambda i: (0, 0)),                      # wredh bot
            pl.BlockSpec((1, Hp), lambda i: (0, 0)),                       # bredh
            pl.BlockSpec((Hp, Hp), lambda i: (0, 0)),                      # wredc top
            pl.BlockSpec((Hp, Hp), lambda i: (0, 0)),                      # wredc bot
            pl.BlockSpec((1, Hp), lambda i: (0, 0)),                       # bredc
        ],
        out_specs=(
            pl.BlockSpec((1, Bp, Hp), lambda i: (i, 0, 0)),                # h_fwd(t=i)
            pl.BlockSpec((1, Bp, Hp), lambda i: (Tp - 1 - i, 0, 0)),       # h_bwd
            pl.BlockSpec((Bp, Hp), lambda i: (0, 0)),                      # hidden
            pl.BlockSpec((Bp, Hp), lambda i: (0, 0)),                      # cell
        ),
        out_shape=(
            jax.ShapeDtypeStruct((Tp, Bp, Hp), f32),
            jax.ShapeDtypeStruct((Tp, Bp, Hp), f32),
            jax.ShapeDtypeStruct((Bp, Hp), f32),
            jax.ShapeDtypeStruct((Bp, Hp), f32),
        ),
        scratch_shapes=[pltpu.VMEM((Bp, Hp), f32)] * 4,   # h_f, c_f, h_b, c_b
        compiler_params=cparams(("arbitrary",)),
    )(len_p, gxf, gxb, whhf, whhb, wrht, wrhb, brh, wrct, wrcb, brc)

    # ---------------- phase 3: features + (B, T, 2H) output ----------------
    Tt2 = _chunk(Tp, Bp, max_rows=256, multiple=8)
    feat_p, out_p = pl.pallas_call(
        _feat_kernel,
        grid=(Tp // Tt2,),
        in_specs=[
            pl.BlockSpec((Tt2, Bp, Hp), lambda j: (j, 0, 0)),
            pl.BlockSpec((Tt2, Bp, Hp), lambda j: (j, 0, 0)),
            pl.BlockSpec((Hp, 2 * Hp), lambda j: (0, 0)),
            pl.BlockSpec((Hp, 2 * Hp), lambda j: (0, 0)),
        ],
        out_specs=(
            pl.BlockSpec((Tt2, Bp, 2 * Hp), lambda j: (j, 0, 0)),
            pl.BlockSpec((Bp, Tt2, 2 * Hp), lambda j: (0, j, 0)),
        ),
        out_shape=(
            jax.ShapeDtypeStruct((Tp, Bp, 2 * Hp), f32),
            jax.ShapeDtypeStruct((Bp, Tp, 2 * Hp), f32),
        ),
        compiler_params=cparams(("parallel",)),
    )(outf, outb, wft, wfb)

    # ---- strip padding ----
    feat = feat_p[:T, :B, :2 * H]
    hid = hid_p[:B, :H]
    cell = cell_p[:B, :H]
    if Hp == H:
        out = out_p[:B, :T, :]
    else:
        out = jnp.concatenate([out_p[:B, :T, :H], out_p[:B, :T, Hp:Hp + H]], axis=-1)
    return out, feat, (hid, cell)


# ---------------------------------------------------------------------------
# Params + pure-JAX reference (PyTorch gate order i,f,g,o; unpadded)
# ---------------------------------------------------------------------------
def init_params(key, E, H):
    ks = jax.random.split(key, 13)
    s = 1.0 / (H ** 0.5)
    u = lambda k, shape: jax.random.uniform(k, shape, jnp.float32, -s, s)
    return dict(
        wih_f=u(ks[0], (E, 4 * H)), whh_f=u(ks[1], (H, 4 * H)),
        b_f=u(ks[2], (1, 4 * H)) + u(ks[3], (1, 4 * H)),      # b_ih + b_hh
        wih_b=u(ks[4], (E, 4 * H)), whh_b=u(ks[5], (H, 4 * H)),
        b_b=u(ks[6], (1, 4 * H)) + u(ks[7], (1, 4 * H)),
        wfeat=u(ks[8], (2 * H, 2 * H)),
        wredh=u(ks[9], (2 * H, H)), bredh=u(ks[10], (1, H)),
        wredc=u(ks[11], (2 * H, H)), bredc=u(ks[12], (1, H)),
    )


def reference_forward(x, lengths, p):
    """Pure-JAX reference with identical packed-LSTM semantics (f32)."""
    T, B, _E = x.shape
    H = p["whh_f"].shape[0]
    lens = lengths.reshape(B, 1)

    def step(x_t, h, c, wih, whh, b):
        gates = x_t @ wih + h @ whh + b
        i = jax.nn.sigmoid(gates[:, :H]);       f = jax.nn.sigmoid(gates[:, H:2 * H])
        g = jnp.tanh(gates[:, 2 * H:3 * H]);    o = jax.nn.sigmoid(gates[:, 3 * H:])
        c2 = f * c + i * g
        return o * jnp.tanh(c2), c2

    h = c = jnp.zeros((B, H), jnp.float32)
    out_f = []
    for t in range(T):
        hn, cn = step(x[t], h, c, p["wih_f"], p["whh_f"], p["b_f"])
        m = (t < lens).astype(jnp.float32)
        h = m * hn + (1 - m) * h
        c = m * cn + (1 - m) * c
        out_f.append(m * h)
    hf, cf = h, c

    h = c = jnp.zeros((B, H), jnp.float32)
    out_b = [None] * T
    for t in range(T - 1, -1, -1):
        hn, cn = step(x[t], h, c, p["wih_b"], p["whh_b"], p["b_b"])
        m = (t < lens).astype(jnp.float32)
        h = m * hn + (1 - m) * h
        c = m * cn + (1 - m) * c
        out_b[t] = m * h
    hb, cb = h, c

    out = jnp.stack([jnp.concatenate([a, b], -1) for a, b in zip(out_f, out_b)], 0)
    feat = (out.reshape(T * B, 2 * H) @ p["wfeat"]).reshape(T, B, 2 * H)
    hid = jnp.maximum(jnp.concatenate([hf, hb], -1) @ p["wredh"] + p["bredh"], 0.0)
    cel = jnp.maximum(jnp.concatenate([cf, cb], -1) @ p["wredc"] + p["bredc"], 0.0)
    return jnp.transpose(out, (1, 0, 2)), feat, hid, cel


if __name__ == "__main__":
    T, B, E, H = 8, 2, 32, 32
    key = jax.random.PRNGKey(0)
    k_x, k_p = jax.random.split(key)
    x = jax.random.normal(k_x, (T, B, E), jnp.float32)
    lengths = jnp.array([T, T - 3], dtype=jnp.int32)
    params = init_params(k_p, E, H)

    out, feat, (hid, cell) = jax.block_until_ready(
        encoder_forward(x, lengths, params))

    r_out, r_feat, r_hid, r_cell = reference_forward(x, lengths, params)
    assert out.shape == (B, T, 2 * H) and feat.shape == (T, B, 2 * H)
    assert hid.shape == (B, H) and cell.shape == (B, H)
    # bf16 MXU operands vs f32 reference -> slightly relaxed tolerance.
    assert jnp.allclose(out, r_out, atol=3e-2, rtol=3e-2)
    assert jnp.allclose(feat, r_feat, atol=3e-2, rtol=3e-2)
    assert jnp.allclose(hid, r_hid, atol=3e-2, rtol=3e-2)
    assert jnp.allclose(cell, r_cell, atol=3e-2, rtol=3e-2)
    print("KERNEL_OK")
</pallas_src>

<mosaic_0001>
module attributes {stable_mosaic.version = 11 : i64} {
  func.func @_proj_kernel(%arg0: i32, %arg1: memref<8x16x128xf32, #tpu.memory_space<vmem>>, %arg2: memref<128x512xbf16, #tpu.memory_space<vmem>>, %arg3: memref<128x512xbf16, #tpu.memory_space<vmem>>, %arg4: memref<1x512xf32, #tpu.memory_space<vmem>>, %arg5: memref<1x512xf32, #tpu.memory_space<vmem>>, %arg6: memref<8x16x512xf32, #tpu.memory_space<vmem>>, %arg7: memref<8x16x512xf32, #tpu.memory_space<vmem>>) attributes {dimension_semantics = [#tpu.dimension_semantics<parallel>], iteration_bounds = array<i64: 1>, scalar_prefetch = 0 : i64, scratch_operands = 0 : i64, tpu.core_type = #tpu.core_type<tc>, window_params = [{transform_indices = @transform_0, window_bounds = array<i64: 8, 16, 128>}, {pipeline_mode = #tpu.pipeline_mode<synchronous>, transform_indices = @transform_1, window_bounds = array<i64: 128, 512>}, {pipeline_mode = #tpu.pipeline_mode<synchronous>, transform_indices = @transform_2, window_bounds = array<i64: 128, 512>}, {pipeline_mode = #tpu.pipeline_mode<synchronous>, transform_indices = @transform_3, window_bounds = array<i64: 1, 512>}, {pipeline_mode = #tpu.pipeline_mode<synchronous>, transform_indices = @transform_4, window_bounds = array<i64: 1, 512>}, {transform_indices = @transform_5, window_bounds = array<i64: 8, 16, 512>}, {transform_indices = @transform_6, window_bounds = array<i64: 8, 16, 512>}]} {
    %c0 = arith.constant 0 : index
    %c0_0 = arith.constant 0 : index
    %c0_1 = arith.constant 0 : index
    %0 = vector.load %arg1[%c0, %c0_0, %c0_1] : memref<8x16x128xf32, #tpu.memory_space<vmem>>, vector<8x16x128xf32>
    %1 = vector.shape_cast %0 : vector<8x16x128xf32> to vector<128x128xf32>
    %2 = arith.truncf %1 : vector<128x128xf32> to vector<128x128xbf16>
    %c0_2 = arith.constant 0 : index
    %c0_3 = arith.constant 0 : index
    %3 = vector.load %arg2[%c0_2, %c0_3] : memref<128x512xbf16, #tpu.memory_space<vmem>>, vector<128x512xbf16>
    %cst = arith.constant dense<0.000000e+00> : vector<128x512xf32>
    %4 = tpu.matmul %2, %3, %cst {dimension_numbers = #tpu.dot_dimension_numbers<[1], [0], [0], [1], [0, 0, 1, 1], [], []>} : vector<128x128xbf16>, vector<128x512xbf16>, vector<128x512xf32> -> vector<128x512xf32>
    %c0_4 = arith.constant 0 : index
    %c0_5 = arith.constant 0 : index
    %5 = vector.load %arg4[%c0_4, %c0_5] : memref<1x512xf32, #tpu.memory_space<vmem>>, vector<1x512xf32>
    %6 = vector.broadcast %5 : vector<1x512xf32> to vector<128x512xf32>
    %7 = arith.addf %4, %6 : vector<128x512xf32>
    %c0_6 = arith.constant 0 : index
    %c0_7 = arith.constant 0 : index
    %8 = vector.load %arg3[%c0_6, %c0_7] : memref<128x512xbf16, #tpu.memory_space<vmem>>, vector<128x512xbf16>
    %cst_8 = arith.constant dense<0.000000e+00> : vector<128x512xf32>
    %9 = tpu.matmul %2, %8, %cst_8 {dimension_numbers = #tpu.dot_dimension_numbers<[1], [0], [0], [1], [0, 0, 1, 1], [], []>} : vector<128x128xbf16>, vector<128x512xbf16>, vector<128x512xf32> -> vector<128x512xf32>
    %c0_9 = arith.constant 0 : index
    %c0_10 = arith.constant 0 : index
    %10 = vector.load %arg5[%c0_9, %c0_10] : memref<1x512xf32, #tpu.memory_space<vmem>>, vector<1x512xf32>
    %11 = vector.broadcast %10 : vector<1x512xf32> to vector<128x512xf32>
    %12 = arith.addf %9, %11 : vector<128x512xf32>
    %13 = vector.shape_cast %7 : vector<128x512xf32> to vector<8x16x512xf32>
    %c0_11 = arith.constant 0 : index
    %c0_12 = arith.constant 0 : index
    %c0_13 = arith.constant 0 : index
    %14 = vector.load %arg6[%c0_11, %c0_12, %c0_13] : memref<8x16x512xf32, #tpu.memory_space<vmem>>, vector<8x16x512xf32>
    tpu.vector_store %arg6[%c0_11, %c0_12, %c0_13], %13 {strides = array<i32>} : memref<8x16x512xf32, #tpu.memory_space<vmem>>, vector<8x16x512xf32>,
    %15 = vector.shape_cast %12 : vector<128x512xf32> to vector<8x16x512xf32>
    %c0_14 = arith.constant 0 : index
    %c0_15 = arith.constant 0 : index
    %c0_16 = arith.constant 0 : index
    %16 = vector.load %arg7[%c0_14, %c0_15, %c0_16] : memref<8x16x512xf32, #tpu.memory_space<vmem>>, vector<8x16x512xf32>
    tpu.vector_store %arg7[%c0_14, %c0_15, %c0_16], %15 {strides = array<i32>} : memref<8x16x512xf32, #tpu.memory_space<vmem>>, vector<8x16x512xf32>,
    return
  }
  func.func @transform_0(%arg0: i32) -> (i32, i32, i32) {
    %c0_i32 = arith.constant 0 : i32
    %c0_i32_0 = arith.constant 0 : i32
    %c0_i32_1 = arith.constant 0 : i32
    return %arg0, %c0_i32, %c0_i32_0 : i32, i32, i32
  }
  func.func @transform_1(%arg0: i32) -> (i32, i32) {
    %c0_i32 = arith.constant 0 : i32
    %c0_i32_0 = arith.constant 0 : i32
    %c0_i32_1 = arith.constant 0 : i32
    return %c0_i32, %c0_i32_0 : i32, i32
  }
  func.func @transform_2(%arg0: i32) -> (i32, i32) {
    %c0_i32 = arith.constant 0 : i32
    %c0_i32_0 = arith.constant 0 : i32
    %c0_i32_1 = arith.constant 0 : i32
    return %c0_i32, %c0_i32_0 : i32, i32
  }
  func.func @transform_3(%arg0: i32) -> (i32, i32) {
    %c0_i32 = arith.constant 0 : i32
    %c0_i32_0 = arith.constant 0 : i32
    %c0_i32_1 = arith.constant 0 : i32
    return %c0_i32, %c0_i32_0 : i32, i32
  }
  func.func @transform_4(%arg0: i32) -> (i32, i32) {
    %c0_i32 = arith.constant 0 : i32
    %c0_i32_0 = arith.constant 0 : i32
    %c0_i32_1 = arith.constant 0 : i32
    return %c0_i32, %c0_i32_0 : i32, i32
  }
  func.func @transform_5(%arg0: i32) -> (i32, i32, i32) {
    %c0_i32 = arith.constant 0 : i32
    %c0_i32_0 = arith.constant 0 : i32
    %c0_i32_1 = arith.constant 0 : i32
    return %arg0, %c0_i32, %c0_i32_0 : i32, i32, i32
  }
  func.func @transform_6(%arg0: i32) -> (i32, i32, i32) {
    %c0_i32 = arith.constant 0 : i32
    %c0_i32_0 = arith.constant 0 : i32
    %c0_i32_1 = arith.constant 0 : i32
    return %arg0, %c0_i32, %c0_i32_0 : i32, i32, i32
  }
}

</mosaic_0001>

<llo_original>
// kernel: tpu_custom_call.1
$region0: #{tpu_custom_call.1}
  #allocation0 [shape = 'u32[]', space=smem, size = 0x4, offset = 0x4, fixed_abs, tag = 'smem constant byte address 0x4 - core index']
  #allocation1 [shape = 'u32[144,128]{1,0:T(1,128)}', space=vmem, size = 0x12000, scoped, tag = 'internal scratch']
  %s0 = inlined_call_operand.hbm [shape: f32[8,16,128], index: 0, kind: input, shape index: {}]
  %s1 = inlined_call_operand.hbm [shape: bf16[128,512], index: 1, kind: input, shape index: {}]
  %s2 = inlined_call_operand.hbm [shape: bf16[128,512], index: 2, kind: input, shape index: {}]
  %s3 = inlined_call_operand.vmem [shape: f32[1,512], index: 3, kind: input, shape index: {}]
  %s4 = inlined_call_operand.hbm [shape: f32[1,512], index: 4, kind: input, shape index: {}]
  %s5 = inlined_call_operand.hbm [shape: f32[8,16,512], index: 5, kind: output, shape index: {0}]
  %s6 = inlined_call_operand.hbm [shape: f32[8,16,512], index: 6, kind: output, shape index: {1}]
  %7 = xla_tuple %s5, %s6
  %s8 = sld [smem:[#allocation0]]
  $region54: #{tpu_custom_call.1} parent=0
    _
  %s10 = ssub.s32 1, %s8
  %s11 = scalar_select 0, %s10, %s8
  $region1: #{tpu_custom_call.1} parent=0
    #allocation2 [shape = 'u8[65536]{0}', space=vmem, size = 0x10000, scoped, tag = 'input window, operand 0, single buffered']
    #allocation3 [shape = 's32[1]{0}', space=sflag, size = 0x4, scoped, tag = 'scoped memory for tpu_custom_call.1']
    #allocation4 [shape = 's32[1]{0}', space=sflag, size = 0x4, scoped, tag = 'scoped memory for tpu_custom_call.1']
    #allocation5 [shape = 'u8[131072]{0}', space=vmem, size = 0x20000, scoped, tag = 'input window, operand 1, single buffered']
    #allocation6 [shape = 's32[1]{0}', space=sflag, size = 0x4, scoped, tag = 'scoped memory for tpu_custom_call.1']
    #allocation7 [shape = 'u8[131072]{0}', space=vmem, size = 0x20000, scoped, tag = 'input window, operand 2, single buffered']
    #allocation8 [shape = 'u8[2048]{0}', space=vmem, size = 0x800, scoped, tag = 'input window, operand 4, single buffered']
    #allocation9 [shape = 's32[1]{0}', space=sflag, size = 0x4, scoped, tag = 'scoped memory for tpu_custom_call.1']
    #allocation10 [shape = 'u8[262144]{0}', space=vmem, size = 0x40000, scoped, tag = 'output window, operand 0, single buffered']
    #allocation11 [shape = 'u8[262144]{0}', space=vmem, size = 0x40000, scoped, tag = 'output window, operand 1, single buffered']
    #allocation12 [shape = 's32[1]{0}', space=sflag, size = 0x4, scoped, tag = 'scoped memory for tpu_custom_call.1']
    %12 = vsyncpa [#allocation3], 0
    %13 = vsyncpa [#allocation6], 0
    %14 = vsyncpa [#allocation9], 0
    %15 = vsyncpa [#allocation4], 0
    %16 = vsyncpa [#allocation12], 0
    // Predicated region
    $region2: #{tpu_custom_call.1} parent=1 // pred_check
      _
    $region3: #{tpu_custom_call.1} parent=1 // pred_check_branch
      %18 = sbr.rel (0) target = $region5
    $region4: #{tpu_custom_call.1} parent=1 // pred_region
      %s20 = ssub.s32 2048, 2048
      %21 = vsyncadd [#allocation3], %s20
      %s22 = sshll.u32 [#allocation2], 4
      %s23 = int_to_ptr.vmem [resolvable:$true] %s22
      %28 = dma.hbm_to_vmem [thread:$0]  %s0, 2048, %s23, [#allocation3], 128, 128, 8
    $region5: #{tpu_custom_call.1} parent=1 // pred_fallthru
      _
    // Predicated region
    $region6: #{tpu_custom_call.1} parent=1 // pred_check
      _
    $region7: #{tpu_custom_call.1} parent=1 // pred_check_branch
      %30 = sbr.rel (0) target = $region9
    $region8: #{tpu_custom_call.1} parent=1 // pred_region
      %s32 = ssub.s32 4096, 4096
      %33 = vsyncadd [#allocation6], %s32
      %s34 = sshll.u32 [#allocation5], 4
      %s35 = int_to_ptr.vmem [resolvable:$true] %s34
      %40 = dma.hbm_to_vmem [thread:$0]  %s1, 4096, %s35, [#allocation6], 256, 256, 16
    $region9: #{tpu_custom_call.1} parent=1 // pred_fallthru
      _
    // Predicated region
    $region10: #{tpu_custom_call.1} parent=1 // pred_check
      _
    $region11: #{tpu_custom_call.1} parent=1 // pred_check_branch
      %42 = sbr.rel (0) target = $region13
    $region12: #{tpu_custom_call.1} parent=1 // pred_region
      %s44 = ssub.s32 4096, 4096
      %45 = vsyncadd [#allocation6], %s44
      %s46 = sshll.u32 [#allocation7], 4
      %s47 = int_to_ptr.vmem [resolvable:$true] %s46
      %52 = dma.hbm_to_vmem [thread:$0]  %s2, 4096, %s47, [#allocation6], 256, 256, 16
    $region13: #{tpu_custom_call.1} parent=1 // pred_fallthru
      _
    // Predicated region
    $region14: #{tpu_custom_call.1} parent=1 // pred_check
      _
    $region15: #{tpu_custom_call.1} parent=1 // pred_check_branch
      %54 = sbr.rel (0) target = $region17
    $region16: #{tpu_custom_call.1} parent=1 // pred_region
      _
    $region17: #{tpu_custom_call.1} parent=1 // pred_fallthru
      _
    // Predicated region
    $region18: #{tpu_custom_call.1} parent=1 // pred_check
      _
    $region19: #{tpu_custom_call.1} parent=1 // pred_check_branch
      %56 = sbr.rel (0) target = $region21
    $region20: #{tpu_custom_call.1} parent=1 // pred_region
      %s58 = ssub.s32 64, 64
      %59 = vsyncadd [#allocation9], %s58
      %s61 = sshll.u32 [#allocation8], 4
      %s62 = int_to_ptr.vmem [resolvable:$true] %s61
      %64 = dma.hbm_to_vmem [thread:$0]  %s4, 64, %s62, [#allocation9]
    $region21: #{tpu_custom_call.1} parent=1 // pred_fallthru
      _
    // Predicated region
    $region22: #{tpu_custom_call.1} parent=1 // pred_check
      _
    $region23: #{tpu_custom_call.1} parent=1 // pred_check_branch
      %66 = sbr.rel (0) target = $region25
    $region24: #{tpu_custom_call.1} parent=1 // pred_region
      %67 = dma.done [#allocation3], 2048
    $region25: #{tpu_custom_call.1} parent=1 // pred_fallthru
      _
    // Predicated region
    $region26: #{tpu_custom_call.1} parent=1 // pred_check
      _
    $region27: #{tpu_custom_call.1} parent=1 // pred_check_branch
      %69 = sbr.rel (0) target = $region29
    $region28: #{tpu_custom_call.1} parent=1 // pred_region
      %70 = dma.done [#allocation6], 4096
    $region29: #{tpu_custom_call.1} parent=1 // pred_fallthru
      _
    // Predicated region
    $region30: #{tpu_custom_call.1} parent=1 // pred_check
      _
    $region31: #{tpu_custom_call.1} parent=1 // pred_check_branch
      %72 = sbr.rel (0) target = $region33
    $region32: #{tpu_custom_call.1} parent=1 // pred_region
      %73 = dma.done [#allocation6], 4096
    $region33: #{tpu_custom_call.1} parent=1 // pred_fallthru
      _
    // Predicated region
    $region34: #{tpu_custom_call.1} parent=1 // pred_check
      _
    $region35: #{tpu_custom_call.1} parent=1 // pred_check_branch
      %75 = sbr.rel (0) target = $region37
    $region36: #{tpu_custom_call.1} parent=1 // pred_region
      %76 = dma.done [#allocation9], 64
    $region37: #{tpu_custom_call.1} parent=1 // pred_fallthru
      _
    %v78 = vld [vmem:[#allocation2] sm:$0xff]
    %v79 = vld [vmem:[#allocation2 + $0x8] sm:$0xff]
    %v80 = vld [vmem:[#allocation2 + $0x10] sm:$0xff]
    %v81 = vld [vmem:[#allocation2 + $0x18] sm:$0xff]
    %v82 = vld [vmem:[#allocation2 + $0x20] sm:$0xff]
    %v83 = vld [vmem:[#allocation2 + $0x28] sm:$0xff]
    %v84 = vld [vmem:[#allocation2 + $0x30] sm:$0xff]
    %v85 = vld [vmem:[#allocation2 + $0x38] sm:$0xff]
    %v86 = vld [vmem:[#allocation2 + $0x40] sm:$0xff]
    %v87 = vld [vmem:[#allocation2 + $0x48] sm:$0xff]
    %v88 = vld [vmem:[#allocation2 + $0x50] sm:$0xff]
    %v89 = vld [vmem:[#allocation2 + $0x58] sm:$0xff]
    %v90 = vld [vmem:[#allocation2 + $0x60] sm:$0xff]
    %v91 = vld [vmem:[#allocation2 + $0x68] sm:$0xff]
    %v92 = vld [vmem:[#allocation2 + $0x70] sm:$0xff]
    %v93 = vld [vmem:[#allocation2 + $0x78] sm:$0xff]
    %v94 = vpack.c.bf16 %v79, %v78
    %v95 = vpack.c.bf16 %v81, %v80
    %v96 = vpack.c.bf16 %v83, %v82
    %v97 = vpack.c.bf16 %v85, %v84
    %v98 = vpack.c.bf16 %v87, %v86
    %v99 = vpack.c.bf16 %v89, %v88
    %v100 = vpack.c.bf16 %v91, %v90
    %v101 = vpack.c.bf16 %v93, %v92
    %v102 = vld [vmem:[#allocation5] sm:$0xff]
    %v103 = vld [vmem:[#allocation5 + $0x8] sm:$0xff]
    %v104 = vld [vmem:[#allocation5 + $0x10] sm:$0xff]
    %v105 = vld [vmem:[#allocation5 + $0x18] sm:$0xff]
    %v106 = vld [vmem:[#allocation5 + $0x20] sm:$0xff]
    %v107 = vld [vmem:[#allocation5 + $0x28] sm:$0xff]
    %v108 = vld [vmem:[#allocation5 + $0x30] sm:$0xff]
    %v109 = vld [vmem:[#allocation5 + $0x38] sm:$0xff]
    %v110 = vld [vmem:[#allocation5 + $0x40] sm:$0xff]
    %v111 = vld [vmem:[#allocation5 + $0x48] sm:$0xff]
    %v112 = vld [vmem:[#allocation5 + $0x50] sm:$0xff]
    %v113 = vld [vmem:[#allocation5 + $0x58] sm:$0xff]
    %v114 = vld [vmem:[#allocation5 + $0x60] sm:$0xff]
    %v115 = vld [vmem:[#allocation5 + $0x68] sm:$0xff]
    %v116 = vld [vmem:[#allocation5 + $0x70] sm:$0xff]
    %v117 = vld [vmem:[#allocation5 + $0x78] sm:$0xff]
    %v118 = vld [vmem:[#allocation5 + $0x80] sm:$0xff]
    %v119 = vld [vmem:[#allocation5 + $0x88] sm:$0xff]
    %v120 = vld [vmem:[#allocation5 + $0x90] sm:$0xff]
    %v121 = vld [vmem:[#allocation5 + $0x98] sm:$0xff]
    %v122 = vld [vmem:[#allocation5 + $0xa0] sm:$0xff]
    %v123 = vld [vmem:[#allocation5 + $0xa8] sm:$0xff]
    %v124 = vld [vmem:[#allocation5 + $0xb0] sm:$0xff]
    %v125 = vld [vmem:[#allocation5 + $0xb8] sm:$0xff]
    %v126 = vld [vmem:[#allocation5 + $0xc0] sm:$0xff]
    %v127 = vld [vmem:[#allocation5 + $0xc8] sm:$0xff]
    %v128 = vld [vmem:[#allocation5 + $0xd0] sm:$0xff]
    %v129 = vld [vmem:[#allocation5 + $0xd8] sm:$0xff]
    %v130 = vld [vmem:[#allocation5 + $0xe0] sm:$0xff]
    %v131 = vld [vmem:[#allocation5 + $0xe8] sm:$0xff]
    %v132 = vld [vmem:[#allocation5 + $0xf0] sm:$0xff]
    %v133 = vld [vmem:[#allocation5 + $0xf8] sm:$0xff]
    %v134 = vld [vmem:[%s3] sm:$0xf]
    %v136 = vlaneseq
    %v137 = vshrl.u32 %v136, 7
    %v138 = vsub.s32 0, %v137
    %v139 = vrot.slane %v134, %v138
    %v140 = vlaneseq
    %v141 = vshrl.u32 %v140, 7
    %v142 = vsub.s32 1, %v141
    %v143 = vrot.slane %v134, %v142
    %v144 = vlaneseq
    %v145 = vshrl.u32 %v144, 7
    %v146 = vsub.s32 2, %v145
    %v147 = vrot.slane %v134, %v146
    %v148 = vlaneseq
    %v149 = vshrl.u32 %v148, 7
    %v150 = vsub.s32 3, %v149
    %v151 = vrot.slane %v134, %v150
    %v188 = vunpack.c.l.b16 %v102
    %v189 = vunpack.c.h.b16 %v102
    %v190 = vunpack.c.l.b16 %v103
    %v191 = vunpack.c.h.b16 %v103
    %v192 = vunpack.c.l.b16 %v104
    %v193 = vunpack.c.h.b16 %v104
    %v194 = vunpack.c.l.b16 %v105
    %v195 = vunpack.c.h.b16 %v105
    %v196 = vunpack.c.l.b16 %v106
    %v197 = vunpack.c.h.b16 %v106
    %v198 = vunpack.c.l.b16 %v107
    %v199 = vunpack.c.h.b16 %v107
    %v200 = vunpack.c.l.b16 %v108
    %v201 = vunpack.c.h.b16 %v108
    %v202 = vunpack.c.l.b16 %v109
    %v203 = vunpack.c.h.b16 %v109
    %v204 = vunpack.c.l.b16 %v110
    %v205 = vunpack.c.h.b16 %v110
    %v206 = vunpack.c.l.b16 %v111
    %v207 = vunpack.c.h.b16 %v111
    %v208 = vunpack.c.l.b16 %v112
    %v209 = vunpack.c.h.b16 %v112
    %v210 = vunpack.c.l.b16 %v113
    %v211 = vunpack.c.h.b16 %v113
    %v212 = vunpack.c.l.b16 %v114
    %v213 = vunpack.c.h.b16 %v114
    %v214 = vunpack.c.l.b16 %v115
    %v215 = vunpack.c.h.b16 %v115
    %v216 = vunpack.c.l.b16 %v116
    %v217 = vunpack.c.h.b16 %v116
    %v218 = vunpack.c.l.b16 %v117
    %v219 = vunpack.c.h.b16 %v117
    %v220 = vunpack.c.l.b16 %v118
    %v221 = vunpack.c.h.b16 %v118
    %v222 = vunpack.c.l.b16 %v119
    %v223 = vunpack.c.h.b16 %v119
    %v224 = vunpack.c.l.b16 %v120
    %v225 = vunpack.c.h.b16 %v120
    %v226 = vunpack.c.l.b16 %v121
    %v227 = vunpack.c.h.b16 %v121
    %v228 = vunpack.c.l.b16 %v122
    %v229 = vunpack.c.h.b16 %v122
    %v230 = vunpack.c.l.b16 %v123
    %v231 = vunpack.c.h.b16 %v123
    %v232 = vunpack.c.l.b16 %v124
    %v233 = vunpack.c.h.b16 %v124
    %v234 = vunpack.c.l.b16 %v125
    %v235 = vunpack.c.h.b16 %v125
    %v236 = vunpack.c.l.b16 %v126
    %v237 = vunpack.c.h.b16 %v126
    %v238 = vunpack.c.l.b16 %v127
    %v239 = vunpack.c.h.b16 %v127
    %v240 = vunpack.c.l.b16 %v128
    %v241 = vunpack.c.h.b16 %v128
    %v242 = vunpack.c.l.b16 %v129
    %v243 = vunpack.c.h.b16 %v129
    %v244 = vunpack.c.l.b16 %v130
    %v245 = vunpack.c.h.b16 %v130
    %v246 = vunpack.c.l.b16 %v131
    %v247 = vunpack.c.h.b16 %v131
    %v248 = vunpack.c.l.b16 %v132
    %v249 = vunpack.c.h.b16 %v132
    %v250 = vunpack.c.l.b16 %v133
    %v251 = vunpack.c.h.b16 %v133
    %v252 = vpack.c.b16 %v192, %v188
    %v253 = vpack.c.b16 %v193, %v189
    %v254 = vpack.c.b16 %v194, %v190
    %v255 = vpack.c.b16 %v195, %v191
    %v256 = vpack.c.b16 %v200, %v196
    %v257 = vpack.c.b16 %v201, %v197
    %v258 = vpack.c.b16 %v202, %v198
    %v259 = vpack.c.b16 %v203, %v199
    %v260 = vpack.c.b16 %v208, %v204
    %v261 = vpack.c.b16 %v209, %v205
    %v262 = vpack.c.b16 %v210, %v206
    %v263 = vpack.c.b16 %v211, %v207
    %v264 = vpack.c.b16 %v216, %v212
    %v265 = vpack.c.b16 %v217, %v213
    %v266 = vpack.c.b16 %v218, %v214
    %v267 = vpack.c.b16 %v219, %v215
    %v268 = vpack.c.b16 %v224, %v220
    %v269 = vpack.c.b16 %v225, %v221
    %v270 = vpack.c.b16 %v226, %v222
    %v271 = vpack.c.b16 %v227, %v223
    %v272 = vpack.c.b16 %v232, %v228
    %v273 = vpack.c.b16 %v233, %v229
    %v274 = vpack.c.b16 %v234, %v230
    %v275 = vpack.c.b16 %v235, %v231
    %v276 = vpack.c.b16 %v240, %v236
    %v277 = vpack.c.b16 %v241, %v237
    %v278 = vpack.c.b16 %v242, %v238
    %v279 = vpack.c.b16 %v243, %v239
    %v280 = vpack.c.b16 %v248, %v244
    %v281 = vpack.c.b16 %v249, %v245
    %v282 = vpack.c.b16 %v250, %v246
    %v283 = vpack.c.b16 %v251, %v247
    %316 = vmatprep.subr.bf16.mxu0 %v281
    %317 = vmatpush1.bf16.msra.mxu0 %v280
    %318 = vmatprep.subr.bf16.mxu0 %v277
    %319 = vmatpush1.bf16.msra.mxu0 %v276
    %320 = vmatprep.subr.bf16.mxu0 %v273
    %321 = vmatpush1.bf16.msra.mxu0 %v272
    %322 = vmatprep.subr.bf16.mxu0 %v269
    %323 = vmatpush1.bf16.msra.mxu0 %v268
    %324 = vmatprep.subr.bf16.mxu0 %v265
    %325 = vmatpush1.bf16.msra.mxu0 %v264
    %326 = vmatprep.subr.bf16.mxu0 %v261
    %327 = vmatpush1.bf16.msra.mxu0 %v260
    %328 = vmatprep.subr.bf16.mxu0 %v257
    %329 = vmatpush1.bf16.msra.mxu0 %v256
    %330 = vmatprep.subr.bf16.mxu0 %v253
    %331 = vmatpush1.bf16.msra.mxu0 %v252
    %332 = vmatprep.subr.bf16.mxu0 0
    %333 = vmatpush2.bf16.msra.mxu0 0
    %334 = vmatprep.subr.bf16.mxu0 0
    %335 = vmatpush2.bf16.msra.mxu0 0
    %336 = vmatprep.subr.bf16.mxu0 0
    %337 = vmatpush2.bf16.msra.mxu0 0
    %338 = vmatprep.subr.bf16.mxu0 0
    %339 = vmatpush2.bf16.msra.mxu0 0
    %340 = vmatprep.subr.bf16.mxu0 0
    %341 = vmatpush2.bf16.msra.mxu0 0
    %342 = vmatprep.subr.bf16.mxu0 0
    %343 = vmatpush2.bf16.msra.mxu0 0
    %344 = vmatprep.subr.bf16.mxu0 0
    %345 = vmatpush2.bf16.msra.mxu0 0
    %346 = vmatprep.subr.bf16.mxu0 0
    %347 = vmatpush2.bf16.msra.mxu0 0
    %348 = vmatprep.mubr.bf16.mxu0 0
    %349 = vmatmul.mubr.bf16.gmra.mxu0 %v94
    %v350 = vpop.f32.mrf.mxu0
    %v351 = vadd.f32 %v139, %v350
    %v352 = vpop.f32.mrf.mxu0
    %v353 = vadd.f32 %v143, %v352
    %v354 = vpop.f32.mrf.mxu0
    %v355 = vadd.f32 %v139, %v354
    %v356 = vpop.f32.mrf.mxu0
    %v357 = vadd.f32 %v143, %v356
    %358 = vmatprep.mubr.bf16.mxu0 0
    %359 = vmatmul.mubr.bf16.gmra.mxu0 %v95
    %v360 = vpop.f32.mrf.mxu0
    %v361 = vadd.f32 %v139, %v360
    %v362 = vpop.f32.mrf.mxu0
    %v363 = vadd.f32 %v143, %v362
    %v364 = vpop.f32.mrf.mxu0
    %v365 = vadd.f32 %v139, %v364
    %v366 = vpop.f32.mrf.mxu0
    %v367 = vadd.f32 %v143, %v366
    %368 = vmatprep.mubr.bf16.mxu0 0
    %369 = vmatmul.mubr.bf16.gmra.mxu0 %v96
    %v370 = vpop.f32.mrf.mxu0
    %v371 = vadd.f32 %v139, %v370
    %v372 = vpop.f32.mrf.mxu0
    %v373 = vadd.f32 %v143, %v372
    %v374 = vpop.f32.mrf.mxu0
    %v375 = vadd.f32 %v139, %v374
    %v376 = vpop.f32.mrf.mxu0
    %v377 = vadd.f32 %v143, %v376
    %378 = vmatprep.mubr.bf16.mxu0 0
    %379 = vmatmul.mubr.bf16.gmra.mxu0 %v97
    %v380 = vpop.f32.mrf.mxu0
    %v381 = vadd.f32 %v139, %v380
    %v382 = vpop.f32.mrf.mxu0
    %v383 = vadd.f32 %v143, %v382
    %v384 = vpop.f32.mrf.mxu0
    %v385 = vadd.f32 %v139, %v384
    %v386 = vpop.f32.mrf.mxu0
    %v387 = vadd.f32 %v143, %v386
    %388 = vmatprep.mubr.bf16.mxu0 0
    %389 = vmatmul.mubr.bf16.gmra.mxu0 %v98
    %v390 = vpop.f32.mrf.mxu0
    %v391 = vadd.f32 %v139, %v390
    %v392 = vpop.f32.mrf.mxu0
    %v393 = vadd.f32 %v143, %v392
    %v394 = vpop.f32.mrf.mxu0
    %v395 = vadd.f32 %v139, %v394
    %v396 = vpop.f32.mrf.mxu0
    %v397 = vadd.f32 %v143, %v396
    %398 = vmatprep.mubr.bf16.mxu0 0
    %399 = vmatmul.mubr.bf16.gmra.mxu0 %v99
    %v400 = vpop.f32.mrf.mxu0
    %v401 = vadd.f32 %v139, %v400
    %v402 = vpop.f32.mrf.mxu0
    %v403 = vadd.f32 %v143, %v402
    %v404 = vpop.f32.mrf.mxu0
    %v405 = vadd.f32 %v139, %v404
    %v406 = vpop.f32.mrf.mxu0
    %v407 = vadd.f32 %v143, %v406
    %408 = vmatprep.mubr.bf16.mxu0 0
    %409 = vmatmul.mubr.bf16.gmra.mxu0 %v100
    %v410 = vpop.f32.mrf.mxu0
    %v411 = vadd.f32 %v139, %v410
    %v412 = vpop.f32.mrf.mxu0
    %v413 = vadd.f32 %v143, %v412
    %v414 = vpop.f32.mrf.mxu0
    %v415 = vadd.f32 %v139, %v414
    %v416 = vpop.f32.mrf.mxu0
    %v417 = vadd.f32 %v143, %v416
    %418 = vmatprep.mubr.bf16.mxu0 0
    %419 = vmatmul.mubr.bf16.gmra.mxu0 %v101
    %v420 = vpop.f32.mrf.mxu0
    %v421 = vadd.f32 %v139, %v420
    %v422 = vpop.f32.mrf.mxu0
    %v423 = vadd.f32 %v143, %v422
    %v424 = vpop.f32.mrf.mxu0
    %v425 = vadd.f32 %v139, %v424
    %v426 = vpop.f32.mrf.mxu0
    %v427 = vadd.f32 %v143, %v426
    %428 = vdwg.mxu0
    %429 = vmatprep.subr.bf16.mxu0 %v283
    %430 = vmatpush1.bf16.msra.mxu0 %v282
    %431 = vmatprep.subr.bf16.mxu0 %v279
    %432 = vmatpush1.bf16.msra.mxu0 %v278
    %433 = vmatprep.subr.bf16.mxu0 %v275
    %434 = vmatpush1.bf16.msra.mxu0 %v274
    %435 = vmatprep.subr.bf16.mxu0 %v271
    %436 = vmatpush1.bf16.msra.mxu0 %v270
    %437 = vmatprep.subr.bf16.mxu0 %v267
    %438 = vmatpush1.bf16.msra.mxu0 %v266
    %439 = vmatprep.subr.bf16.mxu0 %v263
    %440 = vmatpush1.bf16.msra.mxu0 %v262
    %441 = vmatprep.subr.bf16.mxu0 %v259
    %442 = vmatpush1.bf16.msra.mxu0 %v258
    %443 = vmatprep.subr.bf16.mxu0 %v255
    %444 = vmatpush1.bf16.msra.mxu0 %v254
    %445 = vmatprep.subr.bf16.mxu0 0
    %446 = vmatpush2.bf16.msra.mxu0 0
    %447 = vmatprep.subr.bf16.mxu0 0
    %448 = vmatpush2.bf16.msra.mxu0 0
    %449 = vmatprep.subr.bf16.mxu0 0
    %450 = vmatpush2.bf16.msra.mxu0 0
    %451 = vmatprep.subr.bf16.mxu0 0
    %452 = vmatpush2.bf16.msra.mxu0 0
    %453 = vmatprep.subr.bf16.mxu0 0
    %454 = vmatpush2.bf16.msra.mxu0 0
    %455 = vmatprep.subr.bf16.mxu0 0
    %456 = vmatpush2.bf16.msra.mxu0 0
    %457 = vmatprep.subr.bf16.mxu0 0
    %458 = vmatpush2.bf16.msra.mxu0 0
    %459 = vmatprep.subr.bf16.mxu0 0
    %460 = vmatpush2.bf16.msra.mxu0 0
    %461 = vmatprep.mubr.bf16.mxu0 0
    %462 = vmatmul.mubr.bf16.gmra.mxu0 %v94
    %v463 = vpop.f32.mrf.mxu0
    %v464 = vadd.f32 %v147, %v463
    %v465 = vpop.f32.mrf.mxu0
    %v466 = vadd.f32 %v151, %v465
    %v467 = vpop.f32.mrf.mxu0
    %v468 = vadd.f32 %v147, %v467
    %v469 = vpop.f32.mrf.mxu0
    %v470 = vadd.f32 %v151, %v469
    %471 = vmatprep.mubr.bf16.mxu0 0
    %472 = vmatmul.mubr.bf16.gmra.mxu0 %v95
    %v473 = vpop.f32.mrf.mxu0
    %v474 = vadd.f32 %v147, %v473
    %v475 = vpop.f32.mrf.mxu0
    %v476 = vadd.f32 %v151, %v475
    %v477 = vpop.f32.mrf.mxu0
    %v478 = vadd.f32 %v147, %v477
    %v479 = vpop.f32.mrf.mxu0
    %v480 = vadd.f32 %v151, %v479
    %481 = vmatprep.mubr.bf16.mxu0 0
    %482 = vmatmul.mubr.bf16.gmra.mxu0 %v96
    %v483 = vpop.f32.mrf.mxu0
    %v484 = vadd.f32 %v147, %v483
    %v485 = vpop.f32.mrf.mxu0
    %v486 = vadd.f32 %v151, %v485
    %v487 = vpop.f32.mrf.mxu0
    %v488 = vadd.f32 %v147, %v487
    %v489 = vpop.f32.mrf.mxu0
    %v490 = vadd.f32 %v151, %v489
    %491 = vmatprep.mubr.bf16.mxu0 0
    %492 = vmatmul.mubr.bf16.gmra.mxu0 %v97
    %v493 = vpop.f32.mrf.mxu0
    %v494 = vadd.f32 %v147, %v493
    %v495 = vpop.f32.mrf.mxu0
    %v496 = vadd.f32 %v151, %v495
    %v497 = vpop.f32.mrf.mxu0
    %v498 = vadd.f32 %v147, %v497
    %v499 = vpop.f32.mrf.mxu0
    %v500 = vadd.f32 %v151, %v499
    %501 = vmatprep.mubr.bf16.mxu0 0
    %502 = vmatmul.mubr.bf16.gmra.mxu0 %v98
    %v503 = vpop.f32.mrf.mxu0
    %v504 = vadd.f32 %v147, %v503
    %v505 = vpop.f32.mrf.mxu0
    %v506 = vadd.f32 %v151, %v505
    %v507 = vpop.f32.mrf.mxu0
    %v508 = vadd.f32 %v147, %v507
    %v509 = vpop.f32.mrf.mxu0
    %v510 = vadd.f32 %v151, %v509
    %511 = vmatprep.mubr.bf16.mxu0 0
    %512 = vmatmul.mubr.bf16.gmra.mxu0 %v99
    %v513 = vpop.f32.mrf.mxu0
    %v514 = vadd.f32 %v147, %v513
    %v515 = vpop.f32.mrf.mxu0
    %v516 = vadd.f32 %v151, %v515
    %v517 = vpop.f32.mrf.mxu0
    %v518 = vadd.f32 %v147, %v517
    %v519 = vpop.f32.mrf.mxu0
    %v520 = vadd.f32 %v151, %v519
    %521 = vmatprep.mubr.bf16.mxu0 0
    %522 = vmatmul.mubr.bf16.gmra.mxu0 %v100
    %v523 = vpop.f32.mrf.mxu0
    %v524 = vadd.f32 %v147, %v523
    %v525 = vpop.f32.mrf.mxu0
    %v526 = vadd.f32 %v151, %v525
    %v527 = vpop.f32.mrf.mxu0
    %v528 = vadd.f32 %v147, %v527
    %v529 = vpop.f32.mrf.mxu0
    %v530 = vadd.f32 %v151, %v529
    %531 = vmatprep.mubr.bf16.mxu0 0
    %532 = vmatmul.mubr.bf16.gmra.mxu0 %v101
    %v533 = vpop.f32.mrf.mxu0
    %v534 = vadd.f32 %v147, %v533
    %v535 = vpop.f32.mrf.mxu0
    %v536 = vadd.f32 %v151, %v535
    %v537 = vpop.f32.mrf.mxu0
    %v538 = vadd.f32 %v147, %v537
    %v539 = vpop.f32.mrf.mxu0
    %v540 = vadd.f32 %v151, %v539
    %541 = vdwg.mxu0
    %v542 = vld [vmem:[#allocation7] sm:$0xff]
    %v543 = vld [vmem:[#allocation7 + $0x8] sm:$0xff]
    %v544 = vld [vmem:[#allocation7 + $0x10] sm:$0xff]
    %v545 = vld [vmem:[#allocation7 + $0x18] sm:$0xff]
    %v546 = vld [vmem:[#allocation7 + $0x20] sm:$0xff]
    %v547 = vld [vmem:[#allocation7 + $0x28] sm:$0xff]
    %v548 = vld [vmem:[#allocation7 + $0x30] sm:$0xff]
    %v549 = vld [vmem:[#allocation7 + $0x38] sm:$0xff]
    %v550 = vld [vmem:[#allocation7 + $0x40] sm:$0xff]
    %v551 = vld [vmem:[#allocation7 + $0x48] sm:$0xff]
    %v552 = vld [vmem:[#allocation7 + $0x50] sm:$0xff]
    %v553 = vld [vmem:[#allocation7 + $0x58] sm:$0xff]
    %v554 = vld [vmem:[#allocation7 + $0x60] sm:$0xff]
    %v555 = vld [vmem:[#allocation7 + $0x68] sm:$0xff]
    %v556 = vld [vmem:[#allocation7 + $0x70] sm:$0xff]
    %v557 = vld [vmem:[#allocation7 + $0x78] sm:$0xff]
    %v558 = vld [vmem:[#allocation7 + $0x80] sm:$0xff]
    %v559 = vld [vmem:[#allocation7 + $0x88] sm:$0xff]
    %v560 = vld [vmem:[#allocation7 + $0x90] sm:$0xff]
    %v561 = vld [vmem:[#allocation7 + $0x98] sm:$0xff]
    %v562 = vld [vmem:[#allocation7 + $0xa0] sm:$0xff]
    %v563 = vld [vmem:[#allocation7 + $0xa8] sm:$0xff]
    %v564 = vld [vmem:[#allocation7 + $0xb0] sm:$0xff]
    %v565 = vld [vmem:[#allocation7 + $0xb8] sm:$0xff]
    %v566 = vld [vmem:[#allocation7 + $0xc0] sm:$0xff]
    %v567 = vld [vmem:[#allocation7 + $0xc8] sm:$0xff]
    %v568 = vld [vmem:[#allocation7 + $0xd0] sm:$0xff]
    %v569 = vld [vmem:[#allocation7 + $0xd8] sm:$0xff]
    %v570 = vld [vmem:[#allocation7 + $0xe0] sm:$0xff]
    %v571 = vld [vmem:[#allocation7 + $0xe8] sm:$0xff]
    %v572 = vld [vmem:[#allocation7 + $0xf0] sm:$0xff]
    %v573 = vld [vmem:[#allocation7 + $0xf8] sm:$0xff]
    %v574 = vld [vmem:[#allocation8] sm:$0xf]
    %v576 = vlaneseq
    %v577 = vshrl.u32 %v576, 7
    %v578 = vsub.s32 0, %v577
    %v579 = vrot.slane %v574, %v578
    %v580 = vlaneseq
    %v581 = vshrl.u32 %v580, 7
    %v582 = vsub.s32 1, %v581
    %v583 = vrot.slane %v574, %v582
    %v584 = vlaneseq
    %v585 = vshrl.u32 %v584, 7
    %v586 = vsub.s32 2, %v585
    %v587 = vrot.slane %v574, %v586
    %v588 = vlaneseq
    %v589 = vshrl.u32 %v588, 7
    %v590 = vsub.s32 3, %v589
    %v591 = vrot.slane %v574, %v590
    %v628 = vunpack.c.l.b16 %v542
    %v629 = vunpack.c.h.b16 %v542
    %v630 = vunpack.c.l.b16 %v543
    %v631 = vunpack.c.h.b16 %v543
    %v632 = vunpack.c.l.b16 %v544
    %v633 = vunpack.c.h.b16 %v544
    %v634 = vunpack.c.l.b16 %v545
    %v635 = vunpack.c.h.b16 %v545
    %v636 = vunpack.c.l.b16 %v546
    %v637 = vunpack.c.h.b16 %v546
    %v638 = vunpack.c.l.b16 %v547
    %v639 = vunpack.c.h.b16 %v547
    %v640 = vunpack.c.l.b16 %v548
    %v641 = vunpack.c.h.b16 %v548
    %v642 = vunpack.c.l.b16 %v549
    %v643 = vunpack.c.h.b16 %v549
    %v644 = vunpack.c.l.b16 %v550
    %v645 = vunpack.c.h.b16 %v550
    %v646 = vunpack.c.l.b16 %v551
    %v647 = vunpack.c.h.b16 %v551
    %v648 = vunpack.c.l.b16 %v552
    %v649 = vunpack.c.h.b16 %v552
    %v650 = vunpack.c.l.b16 %v553
    %v651 = vunpack.c.h.b16 %v553
    %v652 = vunpack.c.l.b16 %v554
    %v653 = vunpack.c.h.b16 %v554
    %v654 = vunpack.c.l.b16 %v555
    %v655 = vunpack.c.h.b16 %v555
    %v656 = vunpack.c.l.b16 %v556
    %v657 = vunpack.c.h.b16 %v556
    %v658 = vunpack.c.l.b16 %v557
    %v659 = vunpack.c.h.b16 %v557
    %v660 = vunpack.c.l.b16 %v558
    %v661 = vunpack.c.h.b16 %v558
    %v662 = vunpack.c.l.b16 %v559
    %v663 = vunpack.c.h.b16 %v559
    %v664 = vunpack.c.l.b16 %v560
    %v665 = vunpack.c.h.b16 %v560
    %v666 = vunpack.c.l.b16 %v561
    %v667 = vunpack.c.h.b16 %v561
    %v668 = vunpack.c.l.b16 %v562
    %v669 = vunpack.c.h.b16 %v562
    %v670 = vunpack.c.l.b16 %v563
    %v671 = vunpack.c.h.b16 %v563
    %v672 = vunpack.c.l.b16 %v564
    %v673 = vunpack.c.h.b16 %v564
    %v674 = vunpack.c.l.b16 %v565
    %v675 = vunpack.c.h.b16 %v565
    %v676 = vunpack.c.l.b16 %v566
    %v677 = vunpack.c.h.b16 %v566
    %v678 = vunpack.c.l.b16 %v567
    %v679 = vunpack.c.h.b16 %v567
    %v680 = vunpack.c.l.b16 %v568
    %v681 = vunpack.c.h.b16 %v568
    %v682 = vunpack.c.l.b16 %v569
    %v683 = vunpack.c.h.b16 %v569
    %v684 = vunpack.c.l.b16 %v570
    %v685 = vunpack.c.h.b16 %v570
    %v686 = vunpack.c.l.b16 %v571
    %v687 = vunpack.c.h.b16 %v571
    %v688 = vunpack.c.l.b16 %v572
    %v689 = vunpack.c.h.b16 %v572
    %v690 = vunpack.c.l.b16 %v573
    %v691 = vunpack.c.h.b16 %v573
    %v692 = vpack.c.b16 %v632, %v628
    %v693 = vpack.c.b16 %v633, %v629
    %v694 = vpack.c.b16 %v634, %v630
    %v695 = vpack.c.b16 %v635, %v631
    %v696 = vpack.c.b16 %v640, %v636
    %v697 = vpack.c.b16 %v641, %v637
    %v698 = vpack.c.b16 %v642, %v638
    %v699 = vpack.c.b16 %v643, %v639
    %v700 = vpack.c.b16 %v648, %v644
    %v701 = vpack.c.b16 %v649, %v645
    %v702 = vpack.c.b16 %v650, %v646
    %v703 = vpack.c.b16 %v651, %v647
    %v704 = vpack.c.b16 %v656, %v652
    %v705 = vpack.c.b16 %v657, %v653
    %v706 = vpack.c.b16 %v658, %v654
    %v707 = vpack.c.b16 %v659, %v655
    %v708 = vpack.c.b16 %v664, %v660
    %v709 = vpack.c.b16 %v665, %v661
    %v710 = vpack.c.b16 %v666, %v662
    %v711 = vpack.c.b16 %v667, %v663
    %v712 = vpack.c.b16 %v672, %v668
    %v713 = vpack.c.b16 %v673, %v669
    %v714 = vpack.c.b16 %v674, %v670
    %v715 = vpack.c.b16 %v675, %v671
    %v716 = vpack.c.b16 %v680, %v676
    %v717 = vpack.c.b16 %v681, %v677
    %v718 = vpack.c.b16 %v682, %v678
    %v719 = vpack.c.b16 %v683, %v679
    %v720 = vpack.c.b16 %v688, %v684
    %v721 = vpack.c.b16 %v689, %v685
    %v722 = vpack.c.b16 %v690, %v686
    %v723 = vpack.c.b16 %v691, %v687
    %756 = vmatprep.subr.bf16.mxu0 %v721
    %757 = vmatpush1.bf16.msra.mxu0 %v720
    %758 = vmatprep.subr.bf16.mxu0 %v717
    %759 = vmatpush1.bf16.msra.mxu0 %v716
    %760 = vmatprep.subr.bf16.mxu0 %v713
    %761 = vmatpush1.bf16.msra.mxu0 %v712
    %762 = vmatprep.subr.bf16.mxu0 %v709
    %763 = vmatpush1.bf16.msra.mxu0 %v708
    %764 = vmatprep.subr.bf16.mxu0 %v705
    %765 = vmatpush1.bf16.msra.mxu0 %v704
    %766 = vmatprep.subr.bf16.mxu0 %v701
    %767 = vmatpush1.bf16.msra.mxu0 %v700
    %768 = vmatprep.subr.bf16.mxu0 %v697
    %769 = vmatpush1.bf16.msra.mxu0 %v696
    %770 = vmatprep.subr.bf16.mxu0 %v693
    %771 = vmatpush1.bf16.msra.mxu0 %v692
    %772 = vmatprep.subr.bf16.mxu0 0
    %773 = vmatpush2.bf16.msra.mxu0 0
    %774 = vmatprep.subr.bf16.mxu0 0
    %775 = vmatpush2.bf16.msra.mxu0 0
    %776 = vmatprep.subr.bf16.mxu0 0
    %777 = vmatpush2.bf16.msra.mxu0 0
    %778 = vmatprep.subr.bf16.mxu0 0
    %779 = vmatpush2.bf16.msra.mxu0 0
    %780 = vmatprep.subr.bf16.mxu0 0
    %781 = vmatpush2.bf16.msra.mxu0 0
    %782 = vmatprep.subr.bf16.mxu0 0
    %783 = vmatpush2.bf16.msra.mxu0 0
    %784 = vmatprep.subr.bf16.mxu0 0
    %785 = vmatpush2.bf16.msra.mxu0 0
    %786 = vmatprep.subr.bf16.mxu0 0
    %787 = vmatpush2.bf16.msra.mxu0 0
    %788 = vmatprep.mubr.bf16.mxu0 0
    %789 = vmatmul.mubr.bf16.gmra.mxu0 %v94
    %v790 = vpop.f32.mrf.mxu0
    %v791 = vadd.f32 %v579, %v790
    %v792 = vpop.f32.mrf.mxu0
    %v793 = vadd.f32 %v583, %v792
    %v794 = vpop.f32.mrf.mxu0
    %v795 = vadd.f32 %v579, %v794
    %v796 = vpop.f32.mrf.mxu0
    %v797 = vadd.f32 %v583, %v796
    %798 = vmatprep.mubr.bf16.mxu0 0
    %799 = vmatmul.mubr.bf16.gmra.mxu0 %v95
    %v800 = vpop.f32.mrf.mxu0
    %v801 = vadd.f32 %v579, %v800
    %v802 = vpop.f32.mrf.mxu0
    %v803 = vadd.f32 %v583, %v802
    %v804 = vpop.f32.mrf.mxu0
    %v805 = vadd.f32 %v579, %v804
    %v806 = vpop.f32.mrf.mxu0
    %v807 = vadd.f32 %v583, %v806
    %808 = vmatprep.mubr.bf16.mxu0 0
    %809 = vmatmul.mubr.bf16.gmra.mxu0 %v96
    %v810 = vpop.f32.mrf.mxu0
    %v811 = vadd.f32 %v579, %v810
    %v812 = vpop.f32.mrf.mxu0
    %v813 = vadd.f32 %v583, %v812
    %v814 = vpop.f32.mrf.mxu0
    %v815 = vadd.f32 %v579, %v814
    %v816 = vpop.f32.mrf.mxu0
    %v817 = vadd.f32 %v583, %v816
    %818 = vmatprep.mubr.bf16.mxu0 0
    %819 = vmatmul.mubr.bf16.gmra.mxu0 %v97
    %v820 = vpop.f32.mrf.mxu0
    %v821 = vadd.f32 %v579, %v820
    %v822 = vpop.f32.mrf.mxu0
    %v823 = vadd.f32 %v583, %v822
    %v824 = vpop.f32.mrf.mxu0
    %v825 = vadd.f32 %v579, %v824
    %v826 = vpop.f32.mrf.mxu0
    %v827 = vadd.f32 %v583, %v826
    %828 = vmatprep.mubr.bf16.mxu0 0
    %829 = vmatmul.mubr.bf16.gmra.mxu0 %v98
    %v830 = vpop.f32.mrf.mxu0
    %v831 = vadd.f32 %v579, %v830
    %v832 = vpop.f32.mrf.mxu0
    %v833 = vadd.f32 %v583, %v832
    %v834 = vpop.f32.mrf.mxu0
    %v835 = vadd.f32 %v579, %v834
    %v836 = vpop.f32.mrf.mxu0
    %v837 = vadd.f32 %v583, %v836
    %838 = vmatprep.mubr.bf16.mxu0 0
    %839 = vmatmul.mubr.bf16.gmra.mxu0 %v99
    %v840 = vpop.f32.mrf.mxu0
    %v841 = vadd.f32 %v579, %v840
    %v842 = vpop.f32.mrf.mxu0
    %v843 = vadd.f32 %v583, %v842
    %v844 = vpop.f32.mrf.mxu0
    %v845 = vadd.f32 %v579, %v844
    %v846 = vpop.f32.mrf.mxu0
    %v847 = vadd.f32 %v583, %v846
    %848 = vmatprep.mubr.bf16.mxu0 0
    %849 = vmatmul.mubr.bf16.gmra.mxu0 %v100
    %v850 = vpop.f32.mrf.mxu0
    %v851 = vadd.f32 %v579, %v850
    %v852 = vpop.f32.mrf.mxu0
    %v853 = vadd.f32 %v583, %v852
    %v854 = vpop.f32.mrf.mxu0
    %v855 = vadd.f32 %v579, %v854
    %v856 = vpop.f32.mrf.mxu0
    %v857 = vadd.f32 %v583, %v856
    %858 = vmatprep.mubr.bf16.mxu0 0
    %859 = vmatmul.mubr.bf16.gmra.mxu0 %v101
    %v860 = vpop.f32.mrf.mxu0
    %v861 = vadd.f32 %v579, %v860
    %v862 = vpop.f32.mrf.mxu0
    %v863 = vadd.f32 %v583, %v862
    %v864 = vpop.f32.mrf.mxu0
    %v865 = vadd.f32 %v579, %v864
    %v866 = vpop.f32.mrf.mxu0
    %v867 = vadd.f32 %v583, %v866
    %868 = vdwg.mxu0
    %869 = vmatprep.subr.bf16.mxu0 %v723
    %870 = vmatpush1.bf16.msra.mxu0 %v722
    %871 = vmatprep.subr.bf16.mxu0 %v719
    %872 = vmatpush1.bf16.msra.mxu0 %v718
    %873 = vmatprep.subr.bf16.mxu0 %v715
    %874 = vmatpush1.bf16.msra.mxu0 %v714
    %875 = vmatprep.subr.bf16.mxu0 %v711
    %876 = vmatpush1.bf16.msra.mxu0 %v710
    %877 = vmatprep.subr.bf16.mxu0 %v707
    %878 = vmatpush1.bf16.msra.mxu0 %v706
    %879 = vmatprep.subr.bf16.mxu0 %v703
    %880 = vmatpush1.bf16.msra.mxu0 %v702
    %881 = vmatprep.subr.bf16.mxu0 %v699
    %882 = vmatpush1.bf16.msra.mxu0 %v698
    %883 = vmatprep.subr.bf16.mxu0 %v695
    %884 = vmatpush1.bf16.msra.mxu0 %v694
    %885 = vmatprep.subr.bf16.mxu0 0
    %886 = vmatpush2.bf16.msra.mxu0 0
    %887 = vmatprep.subr.bf16.mxu0 0
    %888 = vmatpush2.bf16.msra.mxu0 0
    %889 = vmatprep.subr.bf16.mxu0 0
    %890 = vmatpush2.bf16.msra.mxu0 0
    %891 = vmatprep.subr.bf16.mxu0 0
    %892 = vmatpush2.bf16.msra.mxu0 0
    %893 = vmatprep.subr.bf16.mxu0 0
    %894 = vmatpush2.bf16.msra.mxu0 0
    %895 = vmatprep.subr.bf16.mxu0 0
    %896 = vmatpush2.bf16.msra.mxu0 0
    %897 = vmatprep.subr.bf16.mxu0 0
    %898 = vmatpush2.bf16.msra.mxu0 0
    %899 = vmatprep.subr.bf16.mxu0 0
    %900 = vmatpush2.bf16.msra.mxu0 0
    %901 = vmatprep.mubr.bf16.mxu0 0
    %902 = vmatmul.mubr.bf16.gmra.mxu0 %v94
    %v903 = vpop.f32.mrf.mxu0
    %v904 = vadd.f32 %v587, %v903
    %v905 = vpop.f32.mrf.mxu0
    %v906 = vadd.f32 %v591, %v905
    %v907 = vpop.f32.mrf.mxu0
    %v908 = vadd.f32 %v587, %v907
    %v909 = vpop.f32.mrf.mxu0
    %v910 = vadd.f32 %v591, %v909
    %911 = vmatprep.mubr.bf16.mxu0 0
    %912 = vmatmul.mubr.bf16.gmra.mxu0 %v95
    %v913 = vpop.f32.mrf.mxu0
    %v914 = vadd.f32 %v587, %v913
    %v915 = vpop.f32.mrf.mxu0
    %v916 = vadd.f32 %v591, %v915
    %v917 = vpop.f32.mrf.mxu0
    %v918 = vadd.f32 %v587, %v917
    %v919 = vpop.f32.mrf.mxu0
    %v920 = vadd.f32 %v591, %v919
    %921 = vmatprep.mubr.bf16.mxu0 0
    %922 = vmatmul.mubr.bf16.gmra.mxu0 %v96
    %v923 = vpop.f32.mrf.mxu0
    %v924 = vadd.f32 %v587, %v923
    %v925 = vpop.f32.mrf.mxu0
    %v926 = vadd.f32 %v591, %v925
    %v927 = vpop.f32.mrf.mxu0
    %v928 = vadd.f32 %v587, %v927
    %v929 = vpop.f32.mrf.mxu0
    %v930 = vadd.f32 %v591, %v929
    %931 = vmatprep.mubr.bf16.mxu0 0
    %932 = vmatmul.mubr.bf16.gmra.mxu0 %v97
    %v933 = vpop.f32.mrf.mxu0
    %v934 = vadd.f32 %v587, %v933
    %v935 = vpop.f32.mrf.mxu0
    %v936 = vadd.f32 %v591, %v935
    %v937 = vpop.f32.mrf.mxu0
    %v938 = vadd.f32 %v587, %v937
    %v939 = vpop.f32.mrf.mxu0
    %v940 = vadd.f32 %v591, %v939
    %941 = vmatprep.mubr.bf16.mxu0 0
    %942 = vmatmul.mubr.bf16.gmra.mxu0 %v98
    %v943 = vpop.f32.mrf.mxu0
    %v944 = vadd.f32 %v587, %v943
    %v945 = vpop.f32.mrf.mxu0
    %v946 = vadd.f32 %v591, %v945
    %v947 = vpop.f32.mrf.mxu0
    %v948 = vadd.f32 %v587, %v947
    %v949 = vpop.f32.mrf.mxu0
    %v950 = vadd.f32 %v591, %v949
    %951 = vmatprep.mubr.bf16.mxu0 0
    %952 = vmatmul.mubr.bf16.gmra.mxu0 %v99
    %v953 = vpop.f32.mrf.mxu0
    %v954 = vadd.f32 %v587, %v953
    %v955 = vpop.f32.mrf.mxu0
    %v956 = vadd.f32 %v591, %v955
    %v957 = vpop.f32.mrf.mxu0
    %v958 = vadd.f32 %v587, %v957
    %v959 = vpop.f32.mrf.mxu0
    %v960 = vadd.f32 %v591, %v959
    %961 = vmatprep.mubr.bf16.mxu0 0
    %962 = vmatmul.mubr.bf16.gmra.mxu0 %v100
    %v963 = vpop.f32.mrf.mxu0
    %v964 = vadd.f32 %v587, %v963
    %v965 = vpop.f32.mrf.mxu0
    %v966 = vadd.f32 %v591, %v965
    %v967 = vpop.f32.mrf.mxu0
    %v968 = vadd.f32 %v587, %v967
    %v969 = vpop.f32.mrf.mxu0
    %v970 = vadd.f32 %v591, %v969
    %971 = vmatprep.mubr.bf16.mxu0 0
    %972 = vmatmul.mubr.bf16.gmra.mxu0 %v101
    %v973 = vpop.f32.mrf.mxu0
    %v974 = vadd.f32 %v587, %v973
    %v975 = vpop.f32.mrf.mxu0
    %v976 = vadd.f32 %v591, %v975
    %v977 = vpop.f32.mrf.mxu0
    %v978 = vadd.f32 %v587, %v977
    %v979 = vpop.f32.mrf.mxu0
    %v980 = vadd.f32 %v591, %v979
    %981 = vdwg.mxu0
    %982 = vst [vmem:[#allocation10] sm:$0xff] %v351
    %983 = vst [vmem:[#allocation10 + $0x8] sm:$0xff] %v353
    %984 = vst [vmem:[#allocation10 + $0x10] sm:$0xff] %v464
    %985 = vst [vmem:[#allocation10 + $0x18] sm:$0xff] %v466
    %986 = vst [vmem:[#allocation10 + $0x20] sm:$0xff] %v355
    %987 = vst [vmem:[#allocation10 + $0x28] sm:$0xff] %v357
    %988 = vst [vmem:[#allocation10 + $0x30] sm:$0xff] %v468
    %989 = vst [vmem:[#allocation10 + $0x38] sm:$0xff] %v470
    %990 = vst [vmem:[#allocation10 + $0x40] sm:$0xff] %v361
    %991 = vst [vmem:[#allocation10 + $0x48] sm:$0xff] %v363
    %992 = vst [vmem:[#allocation10 + $0x50] sm:$0xff] %v474
    %993 = vst [vmem:[#allocation10 + $0x58] sm:$0xff] %v476
    %994 = vst [vmem:[#allocation10 + $0x60] sm:$0xff] %v365
    %995 = vst [vmem:[#allocation10 + $0x68] sm:$0xff] %v367
    %996 = vst [vmem:[#allocation10 + $0x70] sm:$0xff] %v478
    %997 = vst [vmem:[#allocation10 + $0x78] sm:$0xff] %v480
    %998 = vst [vmem:[#allocation10 + $0x80] sm:$0xff] %v371
    %999 = vst [vmem:[#allocation10 + $0x88] sm:$0xff] %v373
    %1000 = vst [vmem:[#allocation10 + $0x90] sm:$0xff] %v484
    %1001 = vst [vmem:[#allocation10 + $0x98] sm:$0xff] %v486
    %1002 = vst [vmem:[#allocation10 + $0xa0] sm:$0xff] %v375
    %1003 = vst [vmem:[#allocation10 + $0xa8] sm:$0xff] %v377
    %1004 = vst [vmem:[#allocation10 + $0xb0] sm:$0xff] %v488
    %1005 = vst [vmem:[#allocation10 + $0xb8] sm:$0xff] %v490
    %1006 = vst [vmem:[#allocation10 + $0xc0] sm:$0xff] %v381
    %1007 = vst [vmem:[#allocation10 + $0xc8] sm:$0xff] %v383
    %1008 = vst [vmem:[#allocation10 + $0xd0] sm:$0xff] %v494
    %1009 = vst [vmem:[#allocation10 + $0xd8] sm:$0xff] %v496
    %1010 = vst [vmem:[#allocation10 + $0xe0] sm:$0xff] %v385
    %1011 = vst [vmem:[#allocation10 + $0xe8] sm:$0xff] %v387
    %1012 = vst [vmem:[#allocation10 + $0xf0] sm:$0xff] %v498
    %1013 = vst [vmem:[#allocation10 + $0xf8] sm:$0xff] %v500
    %1014 = vst [vmem:[#allocation10 + $0x100] sm:$0xff] %v391
    %1015 = vst [vmem:[#allocation10 + $0x108] sm:$0xff] %v393
    %1016 = vst [vmem:[#allocation10 + $0x110] sm:$0xff] %v504
    %1017 = vst [vmem:[#allocation10 + $0x118] sm:$0xff] %v506
    %1018 = vst [vmem:[#allocation10 + $0x120] sm:$0xff] %v395
    %1019 = vst [vmem:[#allocation10 + $0x128] sm:$0xff] %v397
    %1020 = vst [vmem:[#allocation10 + $0x130] sm:$0xff] %v508
    %1021 = vst [vmem:[#allocation10 + $0x138] sm:$0xff] %v510
    %1022 = vst [vmem:[#allocation10 + $0x140] sm:$0xff] %v401
    %1023 = vst [vmem:[#allocation10 + $0x148] sm:$0xff] %v403
    %1024 = vst [vmem:[#allocation10 + $0x150] sm:$0xff] %v514
    %1025 = vst [vmem:[#allocation10 + $0x158] sm:$0xff] %v516
    %1026 = vst [vmem:[#allocation10 + $0x160] sm:$0xff] %v405
    %1027 = vst [vmem:[#allocation10 + $0x168] sm:$0xff] %v407
    %1028 = vst [vmem:[#allocation10 + $0x170] sm:$0xff] %v518
    %1029 = vst [vmem:[#allocation10 + $0x178] sm:$0xff] %v520
    %1030 = vst [vmem:[#allocation10 + $0x180] sm:$0xff] %v411
    %1031 = vst [vmem:[#allocation10 + $0x188] sm:$0xff] %v413
    %1032 = vst [vmem:[#allocation10 + $0x190] sm:$0xff] %v524
    %1033 = vst [vmem:[#allocation10 + $0x198] sm:$0xff] %v526
    %1034 = vst [vmem:[#allocation10 + $0x1a0] sm:$0xff] %v415
    %1035 = vst [vmem:[#allocation10 + $0x1a8] sm:$0xff] %v417
    %1036 = vst [vmem:[#allocation10 + $0x1b0] sm:$0xff] %v528
    %1037 = vst [vmem:[#allocation10 + $0x1b8] sm:$0xff] %v530
    %1038 = vst [vmem:[#allocation10 + $0x1c0] sm:$0xff] %v421
    %1039 = vst [vmem:[#allocation10 + $0x1c8] sm:$0xff] %v423
    %1040 = vst [vmem:[#allocation10 + $0x1d0] sm:$0xff] %v534
    %1041 = vst [vmem:[#allocation10 + $0x1d8] sm:$0xff] %v536
    %1042 = vst [vmem:[#allocation10 + $0x1e0] sm:$0xff] %v425
    %1043 = vst [vmem:[#allocation10 + $0x1e8] sm:$0xff] %v427
    %1044 = vst [vmem:[#allocation10 + $0x1f0] sm:$0xff] %v538
    %1045 = vst [vmem:[#allocation10 + $0x1f8] sm:$0xff] %v540
    %1046 = vst [vmem:[#allocation11] sm:$0xff] %v791
    %1047 = vst [vmem:[#allocation11 + $0x8] sm:$0xff] %v793
    %1048 = vst [vmem:[#allocation11 + $0x10] sm:$0xff] %v904
    %1049 = vst [vmem:[#allocation11 + $0x18] sm:$0xff] %v906
    %1050 = vst [vmem:[#allocation11 + $0x20] sm:$0xff] %v795
    %1051 = vst [vmem:[#allocation11 + $0x28] sm:$0xff] %v797
    %1052 = vst [vmem:[#allocation11 + $0x30] sm:$0xff] %v908
    %1053 = vst [vmem:[#allocation11 + $0x38] sm:$0xff] %v910
    %1054 = vst [vmem:[#allocation11 + $0x40] sm:$0xff] %v801
    %1055 = vst [vmem:[#allocation11 + $0x48] sm:$0xff] %v803
    %1056 = vst [vmem:[#allocation11 + $0x50] sm:$0xff] %v914
    %1057 = vst [vmem:[#allocation11 + $0x58] sm:$0xff] %v916
    %1058 = vst [vmem:[#allocation11 + $0x60] sm:$0xff] %v805
    %1059 = vst [vmem:[#allocation11 + $0x68] sm:$0xff] %v807
    %1060 = vst [vmem:[#allocation11 + $0x70] sm:$0xff] %v918
    %1061 = vst [vmem:[#allocation11 + $0x78] sm:$0xff] %v920
    %1062 = vst [vmem:[#allocation11 + $0x80] sm:$0xff] %v811
    %1063 = vst [vmem:[#allocation11 + $0x88] sm:$0xff] %v813
    %1064 = vst [vmem:[#allocation11 + $0x90] sm:$0xff] %v924
    %1065 = vst [vmem:[#allocation11 + $0x98] sm:$0xff] %v926
    %1066 = vst [vmem:[#allocation11 + $0xa0] sm:$0xff] %v815
    %1067 = vst [vmem:[#allocation11 + $0xa8] sm:$0xff] %v817
    %1068 = vst [vmem:[#allocation11 + $0xb0] sm:$0xff] %v928
    %1069 = vst [vmem:[#allocation11 + $0xb8] sm:$0xff] %v930
    %1070 = vst [vmem:[#allocation11 + $0xc0] sm:$0xff] %v821
    %1071 = vst [vmem:[#allocation11 + $0xc8] sm:$0xff] %v823
    %1072 = vst [vmem:[#allocation11 + $0xd0] sm:$0xff] %v934
    %1073 = vst [vmem:[#allocation11 + $0xd8] sm:$0xff] %v936
    %1074 = vst [vmem:[#allocation11 + $0xe0] sm:$0xff] %v825
    %1075 = vst [vmem:[#allocation11 + $0xe8] sm:$0xff] %v827
    %1076 = vst [vmem:[#allocation11 + $0xf0] sm:$0xff] %v938
    %1077 = vst [vmem:[#allocation11 + $0xf8] sm:$0xff] %v940
    %1078 = vst [vmem:[#allocation11 + $0x100] sm:$0xff] %v831
    %1079 = vst [vmem:[#allocation11 + $0x108] sm:$0xff] %v833
    %1080 = vst [vmem:[#allocation11 + $0x110] sm:$0xff] %v944
    %1081 = vst [vmem:[#allocation11 + $0x118] sm:$0xff] %v946
    %1082 = vst [vmem:[#allocation11 + $0x120] sm:$0xff] %v835
    %1083 = vst [vmem:[#allocation11 + $0x128] sm:$0xff] %v837
    %1084 = vst [vmem:[#allocation11 + $0x130] sm:$0xff] %v948
    %1085 = vst [vmem:[#allocation11 + $0x138] sm:$0xff] %v950
    %1086 = vst [vmem:[#allocation11 + $0x140] sm:$0xff] %v841
    %1087 = vst [vmem:[#allocation11 + $0x148] sm:$0xff] %v843
    %1088 = vst [vmem:[#allocation11 + $0x150] sm:$0xff] %v954
    %1089 = vst [vmem:[#allocation11 + $0x158] sm:$0xff] %v956
    %1090 = vst [vmem:[#allocation11 + $0x160] sm:$0xff] %v845
    %1091 = vst [vmem:[#allocation11 + $0x168] sm:$0xff] %v847
    %1092 = vst [vmem:[#allocation11 + $0x170] sm:$0xff] %v958
    %1093 = vst [vmem:[#allocation11 + $0x178] sm:$0xff] %v960
    %1094 = vst [vmem:[#allocation11 + $0x180] sm:$0xff] %v851
    %1095 = vst [vmem:[#allocation11 + $0x188] sm:$0xff] %v853
    %1096 = vst [vmem:[#allocation11 + $0x190] sm:$0xff] %v964
    %1097 = vst [vmem:[#allocation11 + $0x198] sm:$0xff] %v966
    %1098 = vst [vmem:[#allocation11 + $0x1a0] sm:$0xff] %v855
    %1099 = vst [vmem:[#allocation11 + $0x1a8] sm:$0xff] %v857
    %1100 = vst [vmem:[#allocation11 + $0x1b0] sm:$0xff] %v968
    %1101 = vst [vmem:[#allocation11 + $0x1b8] sm:$0xff] %v970
    %1102 = vst [vmem:[#allocation11 + $0x1c0] sm:$0xff] %v861
    %1103 = vst [vmem:[#allocation11 + $0x1c8] sm:$0xff] %v863
    %1104 = vst [vmem:[#allocation11 + $0x1d0] sm:$0xff] %v974
    %1105 = vst [vmem:[#allocation11 + $0x1d8] sm:$0xff] %v976
    %1106 = vst [vmem:[#allocation11 + $0x1e0] sm:$0xff] %v865
    %1107 = vst [vmem:[#allocation11 + $0x1e8] sm:$0xff] %v867
    %1108 = vst [vmem:[#allocation11 + $0x1f0] sm:$0xff] %v978
    %1109 = vst [vmem:[#allocation11 + $0x1f8] sm:$0xff] %v980
    // Predicated region
    $region38: #{tpu_custom_call.1} parent=1 // pred_check
      _
    $region39: #{tpu_custom_call.1} parent=1 // pred_check_branch
      %1111 = sbr.rel (0) target = $region41
    $region40: #{tpu_custom_call.1} parent=1 // pred_region
      %s1113 = ssub.s32 8192, 8192
      %1114 = vsyncadd [#allocation4], %s1113
      %s1115 = sshll.u32 [#allocation10], 4
      %s1116 = int_to_ptr.vmem [resolvable:$true] %s1115
      %1121 = dma.vmem_to_hbm [thread:$0]  %s1116, 8192, %s5, [#allocation4], 512, 512, 32
    $region41: #{tpu_custom_call.1} parent=1 // pred_fallthru
      _
    // Predicated region
    $region42: #{tpu_custom_call.1} parent=1 // pred_check
      _
    $region43: #{tpu_custom_call.1} parent=1 // pred_check_branch
      %1123 = sbr.rel (0) target = $region45
    $region44: #{tpu_custom_call.1} parent=1 // pred_region
      %s1125 = ssub.s32 8192, 8192
      %1126 = vsyncadd [#allocation12], %s1125
      %s1127 = sshll.u32 [#allocation11], 4
      %s1128 = int_to_ptr.vmem [resolvable:$true] %s1127
      %1133 = dma.vmem_to_hbm [thread:$0]  %s1128, 8192, %s6, [#allocation12], 512, 512, 32
    $region45: #{tpu_custom_call.1} parent=1 // pred_fallthru
      _
    // Predicated region
    $region46: #{tpu_custom_call.1} parent=1 // pred_check
      _
    $region47: #{tpu_custom_call.1} parent=1 // pred_check_branch
      %1135 = sbr.rel (0) target = $region49
    $region48: #{tpu_custom_call.1} parent=1 // pred_region
      %1136 = dma.done [#allocation4], 8192
    $region49: #{tpu_custom_call.1} parent=1 // pred_fallthru
      _
    // Predicated region
    $region50: #{tpu_custom_call.1} parent=1 // pred_check
      _
    $region51: #{tpu_custom_call.1} parent=1 // pred_check_branch
      %1138 = sbr.rel (0) target = $region53
    $region52: #{tpu_custom_call.1} parent=1 // pred_region
      %1139 = dma.done [#allocation12], 8192
    $region53: #{tpu_custom_call.1} parent=1 // pred_fallthru
      _
    %1140 = vsyncpa [#allocation3], 1
    %1141 = vsyncpa [#allocation6], 1
    %1142 = vsyncpa [#allocation9], 1
    %1143 = vsyncpa [#allocation4], 1
    %1144 = vsyncpa [#allocation12], 1

</llo_original>
